<compile_context>
chip_gen: v5e
topology: v5e:2x2
jax: 0.10.0
libtpu: 0.0.40
codegen_flags: <defaults>
</compile_context>

<pallas_src>
import functools

import jax
import jax.numpy as jnp
from jax.experimental import pallas as pl
from jax.experimental.pallas import tpu as pltpu


def _round_up(v, m):
    return ((v + m - 1) // m) * m


# ----------------------------------------------------------------------------
# Kernels
# ----------------------------------------------------------------------------
def _linear_single_block_kernel(x_ref, wt_ref, b_ref, o_ref):
    """Whole problem in one VMEM block: y = x @ w_t + b (exact f32)."""
    o_ref[...] = (
        jnp.dot(x_ref[...], wt_ref[...], preferred_element_type=jnp.float32)
        + b_ref[...]
    ).astype(o_ref.dtype)


def _linear_tiled_kernel(x_ref, wt_ref, b_ref, o_ref, acc_ref):
    """One (tm, tn) output tile; K is the innermost (reduction) grid axis.

    x_ref  : (tm, tk)  activations (compute dtype, e.g. bf16)
    wt_ref : (tk, tn)  pre-transposed weight (compute dtype) -> canonical MXU feed
    b_ref  : (1, tn)   bias (f32)
    o_ref  : (tm, tn)  output tile
    acc_ref: (tm, tn)  f32 VMEM accumulator, resident across the K grid axis
    """
    k = pl.program_id(2)

    @pl.when(k == 0)
    def _init():
        acc_ref[...] = jnp.zeros_like(acc_ref)

    acc_ref[...] += jnp.dot(
        x_ref[...], wt_ref[...], preferred_element_type=jnp.float32
    )

    @pl.when(k == pl.num_programs(2) - 1)
    def _finalize():
        # Bias add + cast exactly once per output tile (f32 epilogue).
        o_ref[...] = (acc_ref[...] + b_ref[...]).astype(o_ref.dtype)


# ----------------------------------------------------------------------------
# Jitted wrappers (weight arrives already preprocessed; only x is touched here)
# ----------------------------------------------------------------------------
@functools.partial(jax.jit, static_argnames=("out_dtype",))
def _linear_small(x, w_t, b2d, *, out_dtype):
    """Single-block path for tiny problems: no grid loop, no padding ops."""
    x = x.astype(jnp.float32)
    B, K = x.shape
    _, N = w_t.shape
    return pl.pallas_call(
        _linear_single_block_kernel,
        out_shape=jax.ShapeDtypeStruct((B, N), out_dtype),
        grid=(1,),
        in_specs=[
            pl.BlockSpec((B, K), lambda i: (0, 0)),   # x (full block)
            pl.BlockSpec((K, N), lambda i: (0, 0)),   # weight^T (full block)
            pl.BlockSpec((1, N), lambda i: (0, 0)),   # bias
        ],
        out_specs=pl.BlockSpec((B, N), lambda i: (0, 0)),
        cost_estimate=pl.CostEstimate(
            flops=2 * B * N * K,
            transcendentals=0,
            bytes_accessed=4 * (B * K + K * N + N + B * N),
        ),
    )(x, w_t, b2d)


@functools.partial(
    jax.jit, static_argnames=("tm", "tn", "tk", "n_valid", "out_dtype")
)
def _linear_tiled(x, w_t_p, b2d_p, *, tm, tn, tk, n_valid, out_dtype):
    """Tiled bf16 MXU path with f32 accumulation for large problems."""
    B, K = x.shape
    Kp, Np = w_t_p.shape
    Mp = _round_up(B, tm)

    # Only the activations need per-call padding/cast; zero-padding K keeps the
    # contraction exact and padded M rows are sliced off below.
    xc = x.astype(w_t_p.dtype)
    if (Mp, Kp) != (B, K):
        xc = jnp.pad(xc, ((0, Mp - B), (0, Kp - K)))

    grid = (Mp // tm, Np // tn, Kp // tk)
    in_bytes = xc.dtype.itemsize
    out_bytes = jnp.dtype(out_dtype).itemsize

    out = pl.pallas_call(
        _linear_tiled_kernel,
        out_shape=jax.ShapeDtypeStruct((Mp, Np), out_dtype),
        grid_spec=pltpu.PrefetchScalarGridSpec(
            num_scalar_prefetch=0,
            grid=grid,
            in_specs=[
                pl.BlockSpec((tm, tk), lambda i, j, k: (i, k)),   # x tile
                pl.BlockSpec((tk, tn), lambda i, j, k: (k, j)),   # weight^T tile
                pl.BlockSpec((1, tn), lambda i, j, k: (0, j)),    # bias tile
            ],
            out_specs=pl.BlockSpec((tm, tn), lambda i, j, k: (i, j)),
            scratch_shapes=[pltpu.VMEM((tm, tn), jnp.float32)],
        ),
        compiler_params=pltpu.CompilerParams(
            # M/N parallel => shards across both TCs on v7x; K is the reduction.
            dimension_semantics=("parallel", "parallel", "arbitrary"),
            # Fits v7x's 64 MiB/TC with headroom; also raises the small scoped
            # defaults on v5e/v6e.  Tiles here use ~7 MiB double-buffered.
            vmem_limit_bytes=48 * 1024 * 1024,
        ),
        cost_estimate=pl.CostEstimate(
            flops=2 * Mp * Np * Kp,
            transcendentals=0,
            bytes_accessed=(Mp * Kp + Kp * Np) * in_bytes + Mp * Np * out_bytes,
        ),
    )(xc, w_t_p, b2d_p)

    return out[:B, :n_valid]


# ----------------------------------------------------------------------------
# Module equivalent of DummyModel (nn.Linear forward)
# ----------------------------------------------------------------------------
class PallasLinear:
    """y = x @ weight.T + bias with weight in PyTorch [out, in] layout."""

    # Below this total f32 footprint the whole problem is one VMEM block; the
    # tiled machinery (pads, 3D grid, accumulator) would just add overhead.
    _SMALL_LIMIT_BYTES = 2 * 1024 * 1024

    def __init__(self, weight, bias, *, compute_dtype=jnp.bfloat16,
                 tn=512, tk=1024, tm_max=512):
        weight = jnp.asarray(weight, jnp.float32)   # [N, K] (PyTorch layout)
        bias = jnp.asarray(bias, jnp.float32)       # [N]
        N, K = weight.shape
        self.in_features = K
        self.out_features = N
        self.tm_max = tm_max
        self.compute_dtype = compute_dtype

        # --- Small-path params: exact f32, (K, N) layout, no padding. --------
        self.w_t_f32 = weight.T                      # (K, N)
        self.b_f32 = bias.reshape(1, N)

        # --- Tiled-path params, preprocessed ONCE (outside the hot path):
        # transpose to lane-dense (K, N), zero-pad to tile multiples, cast bf16.
        self.tn = min(tn, _round_up(N, 128))
        self.tk = min(tk, _round_up(K, 128))
        Kp, Np = _round_up(K, self.tk), _round_up(N, self.tn)
        w_t = jnp.pad(weight.T, ((0, Kp - K), (0, Np - N))).astype(compute_dtype)
        self.w_t_padded = w_t                        # (Kp, Np) compute_dtype
        self.b_padded = jnp.pad(bias, (0, Np - N)).reshape(1, Np)  # f32

    def __call__(self, x, *, out_dtype=None):
        B, K = x.shape
        assert K == self.in_features, "in_features mismatch"
        out_dtype = jnp.dtype(out_dtype or x.dtype)

        f32_bytes = 4 * (B * K + K * self.out_features + B * self.out_features)
        if f32_bytes <= self._SMALL_LIMIT_BYTES:
            return _linear_small(x, self.w_t_f32, self.b_f32, out_dtype=out_dtype)

        tm = min(self.tm_max, _round_up(B, 8))
        tn = self.tn
        Mp = _round_up(B, tm)
        Np = self.w_t_padded.shape[1]
        # v7x megacore: guarantee >= 2 parallel (M, N) blocks so both TCs work.
        if (Mp // tm) * (Np // tn) < 2 and tn >= 256 and Np % (tn // 2) == 0:
            tn //= 2
        return _linear_tiled(
            x, self.w_t_padded, self.b_padded,
            tm=tm, tn=tn, tk=self.tk,
            n_valid=self.out_features, out_dtype=out_dtype,
        )


if __name__ == "__main__":
    # Small shapes implied by the module: batch=8, in_features=32, out_features=16
    B, IN_F, OUT_F = 8, 32, 16

    key = jax.random.PRNGKey(0)
    kx, kw, kb = jax.random.split(key, 3)

    x = jax.random.normal(kx, (B, IN_F), dtype=jnp.float32)
    bound = 1.0 / (IN_F ** 0.5)
    weight = jax.random.uniform(kw, (OUT_F, IN_F), jnp.float32, -bound, bound)
    bias = jax.random.uniform(kb, (OUT_F,), jnp.float32, -bound, bound)

    model = PallasLinear(weight, bias)
    y = model(x)
    jax.block_until_ready(y)

    y_ref = x @ weight.T + bias
    assert y.shape == (B, OUT_F)
    assert jnp.allclose(y, y_ref, atol=1e-5), "single-block path mismatch"

    # Also exercise the tiled bf16 MXU path once at a modest size.
    B2, K2, N2 = 1024, 2048, 1536
    kx2, kw2, kb2 = jax.random.split(jax.random.PRNGKey(1), 3)
    x2 = jax.random.normal(kx2, (B2, K2), jnp.float32)
    w2 = jax.random.normal(kw2, (N2, K2), jnp.float32) / (K2 ** 0.5)
    b2 = jax.random.normal(kb2, (N2,), jnp.float32)

    model2 = PallasLinear(w2, b2)
    y2 = model2(x2)
    jax.block_until_ready(y2)

    y2_ref = x2 @ w2.T + b2
    rel_err = jnp.max(jnp.abs(y2 - y2_ref)) / (jnp.max(jnp.abs(y2_ref)) + 1e-6)
    assert y2.shape == (B2, N2)
    assert rel_err < 2e-2, f"tiled bf16 path error too high: {rel_err}"

    print("KERNEL_OK")
</pallas_src>

<mosaic_0001>
module attributes {stable_mosaic.version = 11 : i64} {
  func.func @_linear_single_block_kernel(%arg0: i32, %arg1: memref<8x32xf32, #tpu.memory_space<vmem>>, %arg2: memref<32x16xf32, #tpu.memory_space<vmem>>, %arg3: memref<1x16xf32, #tpu.memory_space<vmem>>, %arg4: memref<8x16xf32, #tpu.memory_space<vmem>>) attributes {dimension_semantics = [#tpu.dimension_semantics<arbitrary>], iteration_bounds = array<i64: 1>, scalar_prefetch = 0 : i64, scratch_operands = 0 : i64, tpu.core_type = #tpu.core_type<tc>, window_params = [{pipeline_mode = #tpu.pipeline_mode<synchronous>, transform_indices = @transform_0, window_bounds = array<i64: 8, 32>}, {pipeline_mode = #tpu.pipeline_mode<synchronous>, transform_indices = @transform_1, window_bounds = array<i64: 32, 16>}, {pipeline_mode = #tpu.pipeline_mode<synchronous>, transform_indices = @transform_2, window_bounds = array<i64: 1, 16>}, {pipeline_mode = #tpu.pipeline_mode<synchronous>, transform_indices = @transform_3, window_bounds = array<i64: 8, 16>}]} {
    %c0 = arith.constant 0 : index
    %c0_0 = arith.constant 0 : index
    %0 = vector.load %arg1[%c0, %c0_0] : memref<8x32xf32, #tpu.memory_space<vmem>>, vector<8x32xf32>
    %c0_1 = arith.constant 0 : index
    %c0_2 = arith.constant 0 : index
    %1 = vector.load %arg2[%c0_1, %c0_2] : memref<32x16xf32, #tpu.memory_space<vmem>>, vector<32x16xf32>
    %cst = arith.constant dense<0.000000e+00> : vector<8x16xf32>
    %2 = tpu.matmul %0, %1, %cst {dimension_numbers = #tpu.dot_dimension_numbers<[1], [0], [0], [1], [0, 0, 1, 1], [], []>} : vector<8x32xf32>, vector<32x16xf32>, vector<8x16xf32> -> vector<8x16xf32>
    %c0_3 = arith.constant 0 : index
    %c0_4 = arith.constant 0 : index
    %3 = vector.load %arg3[%c0_3, %c0_4] : memref<1x16xf32, #tpu.memory_space<vmem>>, vector<1x16xf32>
    %4 = vector.broadcast %3 : vector<1x16xf32> to vector<8x16xf32>
    %5 = arith.addf %2, %4 : vector<8x16xf32>
    %c0_5 = arith.constant 0 : index
    %c0_6 = arith.constant 0 : index
    %6 = vector.load %arg4[%c0_5, %c0_6] : memref<8x16xf32, #tpu.memory_space<vmem>>, vector<8x16xf32>
    tpu.vector_store %arg4[%c0_5, %c0_6], %5 {strides = array<i32>} : memref<8x16xf32, #tpu.memory_space<vmem>>, vector<8x16xf32>,
    return
  }
  func.func @transform_0(%arg0: i32) -> (i32, i32) {
    %c0_i32 = arith.constant 0 : i32
    %c0_i32_0 = arith.constant 0 : i32
    %c0_i32_1 = arith.constant 0 : i32
    return %c0_i32, %c0_i32_0 : i32, i32
  }
  func.func @transform_1(%arg0: i32) -> (i32, i32) {
    %c0_i32 = arith.constant 0 : i32
    %c0_i32_0 = arith.constant 0 : i32
    %c0_i32_1 = arith.constant 0 : i32
    return %c0_i32, %c0_i32_0 : i32, i32
  }
  func.func @transform_2(%arg0: i32) -> (i32, i32) {
    %c0_i32 = arith.constant 0 : i32
    %c0_i32_0 = arith.constant 0 : i32
    %c0_i32_1 = arith.constant 0 : i32
    return %c0_i32, %c0_i32_0 : i32, i32
  }
  func.func @transform_3(%arg0: i32) -> (i32, i32) {
    %c0_i32 = arith.constant 0 : i32
    %c0_i32_0 = arith.constant 0 : i32
    %c0_i32_1 = arith.constant 0 : i32
    return %c0_i32, %c0_i32_0 : i32, i32
  }
}

</mosaic_0001>

<llo_original>
// kernel: _linear_small.1
$region0: #{_linear_small.1}
  #allocation0 [shape = 'u32[]', space=smem, size = 0x4, offset = 0x4, fixed_abs, tag = 'smem constant byte address 0x4 - core index']
  #allocation1 [shape = 'u32[72,128]{1,0:T(1,128)}', space=vmem, size = 0x9000, scoped, tag = 'internal scratch']
  %s0 = inlined_call_operand.vmem [shape: f32[8,32], index: 0, kind: input, shape index: {}]
  %s1 = inlined_call_operand.vmem [shape: f32[32,16], index: 1, kind: input, shape index: {}]
  %s2 = inlined_call_operand.vmem [shape: f32[1,16], index: 2, kind: input, shape index: {}]
  %s3 = inlined_call_operand.hbm [shape: f32[8,16], index: 3, kind: output, shape index: {}]
  %s4 = sld [smem:[#allocation0]]
  $region22: #{_linear_small.1} parent=0
    _
  %s6 = ssub.s32 1, %s4
  %s7 = scalar_select 0, %s6, %s4
  $region1: #{_linear_small.1} parent=0
    #allocation2 [shape = 'u8[4096]{0}', space=vmem, size = 0x1000, scoped, tag = 'output window, operand 0, single buffered']
    #allocation3 [shape = 's32[1]{0}', space=sflag, size = 0x4, scoped, tag = 'scoped memory for _linear_small.1']
    %8 = vsyncpa [#allocation3], 0
    // Predicated region
    $region2: #{_linear_small.1} parent=1 // pred_check
      _
    $region3: #{_linear_small.1} parent=1 // pred_check_branch
      %10 = sbr.rel (0) target = $region5
    $region4: #{_linear_small.1} parent=1 // pred_region
      _
    $region5: #{_linear_small.1} parent=1 // pred_fallthru
      _
    // Predicated region
    $region6: #{_linear_small.1} parent=1 // pred_check
      _
    $region7: #{_linear_small.1} parent=1 // pred_check_branch
      %12 = sbr.rel (0) target = $region9
    $region8: #{_linear_small.1} parent=1 // pred_region
      _
    $region9: #{_linear_small.1} parent=1 // pred_fallthru
      _
    // Predicated region
    $region10: #{_linear_small.1} parent=1 // pred_check
      _
    $region11: #{_linear_small.1} parent=1 // pred_check_branch
      %14 = sbr.rel (0) target = $region13
    $region12: #{_linear_small.1} parent=1 // pred_region
      _
    $region13: #{_linear_small.1} parent=1 // pred_fallthru
      _
    %v15 = vld [vmem:[%s0] sm:$0xff]
    %v16 = vld [vmem:[%s1] sm:$0xff]
    %v17 = vld [vmem:[%s1 + $0x8] sm:$0xff]
    %v18 = vld [vmem:[%s1 + $0x10] sm:$0xff]
    %v19 = vld [vmem:[%s1 + $0x18] sm:$0xff]
    %v20 = vld [vmem:[%s2] sm:$0x1]
    %v22 = vperm.slane %v20, 0
    %vm24 = vcmask 261120
    %v26 = vsel %vm24, %v15, 0
    %28 = vmatpush.msra.mxu0 0.0
    %29 = vmatpush.msra.mxu0 0.0
    %30 = vmatpush.msra.mxu0 0.0
    %31 = vmatpush.msra.mxu0 0.0
    %32 = vmatpush.msra.mxu0 0.0
    %33 = vmatpush.msra.mxu0 0.0
    %34 = vmatpush.msra.mxu0 0.0
    %35 = vmatpush.msra.mxu0 0.0
    %36 = vmatpush.msra.mxu0 0.0
    %37 = vmatpush.msra.mxu0 0.0
    %38 = vmatpush.msra.mxu0 0.0
    %39 = vmatpush.msra.mxu0 0.0
    %40 = vmatpush.msra.mxu0 %v19
    %41 = vmatpush.msra.mxu0 %v18
    %42 = vmatpush.msra.mxu0 %v17
    %43 = vmatpush.msra.mxu0 %v16
    %44 = vmatmul.f32.gmra.mxu0 %v26
    %v45 = vpop.f32.mrf.mxu0
    %v46 = vadd.f32 %v22, %v45
    %47 = vdwg.mxu0
    %vm48 = vcmask 130048
    %49 = vst.msk [vmem:[#allocation2] sm:$0xff] %vm48, %v46
    // Predicated region
    $region14: #{_linear_small.1} parent=1 // pred_check
      _
    $region15: #{_linear_small.1} parent=1 // pred_check_branch
      %51 = sbr.rel (0) target = $region17
    $region16: #{_linear_small.1} parent=1 // pred_region
      %53 = vsyncadd [#allocation3], 0
      %s55 = sshll.u32 [#allocation2], 4
      %s56 = int_to_ptr.vmem [resolvable:$true] %s55
      %s57 = sshll.u32 %s3, 4
      %s58 = int_to_ptr.hbm [resolvable:$true] %s57
      %60 = dma.vmem_to_hbm [thread:$0]  %s56, 128, %s58, [#allocation3]
    $region17: #{_linear_small.1} parent=1 // pred_fallthru
      _
    // Predicated region
    $region18: #{_linear_small.1} parent=1 // pred_check
      _
    $region19: #{_linear_small.1} parent=1 // pred_check_branch
      %62 = sbr.rel (0) target = $region21
    $region20: #{_linear_small.1} parent=1 // pred_region
      %64 = dma.done [#allocation3], 128
    $region21: #{_linear_small.1} parent=1 // pred_fallthru
      _
    %65 = vsyncpa [#allocation3], 1

</llo_original>
